<compile_context>
chip_gen: v7x
topology: tpu7x:2x2x1
jax: 0.10.0
libtpu: 0.0.40
codegen_flags: <defaults>
</compile_context>

<pallas_src>
import jax
import jax.numpy as jnp
import numpy as np
from jax.experimental import pallas as pl
from jax.experimental.pallas import tpu as pltpu


def _round_up(a, m):
    return (a + m - 1) // m * m


def _cdiv(a, b):
    return -(-a // b)


# ---------------------------------------------------------------------------
# Pallas kernel: full fused forward pass over one batch tile
# ---------------------------------------------------------------------------
def _kernel(x_ref, p_ref, wfe_ref, wpe_ref, w1_ref, w2_ref, b_ref, out_ref):
    wfe = wfe_ref[...]                           # (d_x, wpad), cols [0:hd_fe] real
    cdt = wfe.dtype

    # Both encoders in one fused step: the two dots write disjoint zero-padded
    # column ranges, so their sum equals the block-diagonal [fe | pe] encoder.
    enc = (jnp.dot(x_ref[...].astype(cdt), wfe,
                   preferred_element_type=jnp.float32)
           + jnp.dot(p_ref[...].astype(cdt), wpe_ref[...],
                     preferred_element_type=jnp.float32))
    enc = jnp.maximum(enc + b_ref[0:1, :], 0.0)  # f32 bias + ReLU (v5e-safe VPU)

    # cat + linear1 fused (W1 rows packed over both encoder column ranges).
    # Dropout: eval-mode identity.
    # TODO(synk): training-mode dropout would use pltpu.prng_seed + prng_random_bits.
    h = jnp.dot(enc.astype(cdt), w1_ref[...], preferred_element_type=jnp.float32)
    h = jnp.maximum(h + b_ref[1:2, :], 0.0)

    # linear2, lane-dense (zero-padded to wpad columns), narrow-dtype writeback.
    out = jnp.dot(h.astype(cdt), w2_ref[...], preferred_element_type=jnp.float32)
    out_ref[...] = (out + b_ref[2:3, :]).astype(out_ref.dtype)


# ---------------------------------------------------------------------------
# One-time parameter packing (hoisted out of the forward)
# ---------------------------------------------------------------------------
def pack_params(params, compute_dtype=jnp.bfloat16):
    d_x, hd_fe = params["w_fe"].shape
    d_p, hd_pe = params["w_pe"].shape
    hdim = params["w1_x"].shape[1]
    out_dim = params["w2"].shape[1]
    henc = hd_fe + hd_pe
    wpad = max(_round_up(henc, 128), _round_up(hdim, 128), _round_up(out_dim, 128))

    w_fe = jnp.zeros((d_x, wpad), compute_dtype)
    w_fe = w_fe.at[:, :hd_fe].set(params["w_fe"].astype(compute_dtype))
    w_pe = jnp.zeros((d_p, wpad), compute_dtype)
    w_pe = w_pe.at[:, hd_fe:henc].set(params["w_pe"].astype(compute_dtype))

    w1 = jnp.zeros((wpad, wpad), compute_dtype)
    w1 = w1.at[:hd_fe, :hdim].set(params["w1_x"].astype(compute_dtype))
    w1 = w1.at[hd_fe:henc, :hdim].set(params["w1_p"].astype(compute_dtype))

    w2 = jnp.zeros((wpad, wpad), compute_dtype)
    w2 = w2.at[:hdim, :out_dim].set(params["w2"].astype(compute_dtype))

    b = jnp.zeros((3, wpad), jnp.float32)
    b = b.at[0, :hd_fe].set(params["b_fe"].reshape(-1))
    b = b.at[0, hd_fe:henc].set(params["b_pe"].reshape(-1))
    b = b.at[1, :hdim].set(params["b1"].reshape(-1))
    b = b.at[2, :out_dim].set(params["b2"].reshape(-1))

    return {"w_fe": w_fe, "w_pe": w_pe, "w1": w1, "w2": w2, "b": b,
            "out_dim": int(out_dim), "wpad": int(wpad)}


# ---------------------------------------------------------------------------
# Forward wrapper: tiling, VMEM budgeting, pallas_call
# ---------------------------------------------------------------------------
def _choose_tile(batch, tile_rows):
    tile_rows = max(8, int(tile_rows))
    n_tiles = _cdiv(batch, tile_rows)
    if n_tiles == 1 and batch >= 512:   # give v7x's two TensorCores work each
        n_tiles = 2
    return _round_up(_cdiv(batch, n_tiles), 8)


def value_network_prior_forward(x, prior, packed, *,
                                out_dtype=jnp.bfloat16, tile_rows=1024):
    B, d_x = x.shape
    d_p = prior.shape[1]
    wpad = packed["wpad"]
    out_dim = packed["out_dim"]
    out_isz = np.dtype(out_dtype).itemsize

    # ---- VMEM budget: resident weights/biases + per-row activation stream ----
    w_once = sum(int(packed[k].size) * packed[k].dtype.itemsize
                 for k in ("w_fe", "w_pe", "w1", "w2")) + 8 * wpad * 4
    single_buffer_weights = 2 * w_once > (8 << 20)   # only bother for big hdim
    w_resident = w_once * (1 if single_buffer_weights else 2)

    row_bytes = (2 * (d_x * x.dtype.itemsize + d_p * prior.dtype.itemsize)  # inputs (2-buf)
                 + 2 * wpad * out_isz                                       # output (2-buf)
                 + 3 * wpad * 4)                                            # f32 intermediates
    budget = 24 << 20                      # safe under v5e/v6e/v7x scoped VMEM
    room = max(budget - w_resident, 4 << 20)
    max_tm = max((room // row_bytes) // 8 * 8, 64)

    tm = _choose_tile(B, min(tile_rows, max_tm))
    grid = _cdiv(B, tm)                    # ragged last block, no wrapper-side padding

    vmem_limit = int(min(max(32 << 20, 2 * (w_resident + tm * row_bytes)), 48 << 20))

    def _resident_spec(arr):
        kw = {"pipeline_mode": pl.Buffered(1)} if single_buffer_weights else {}
        return pl.BlockSpec(arr.shape, lambda i: (0, 0), **kw)

    flops = 2 * B * ((d_x + d_p) * wpad + 2 * wpad * wpad)
    bytes_accessed = int(x.size * x.dtype.itemsize
                         + prior.size * prior.dtype.itemsize
                         + w_once + B * wpad * out_isz)

    out = pl.pallas_call(
        _kernel,
        out_shape=jax.ShapeDtypeStruct((B, wpad), out_dtype),
        grid=(grid,),
        in_specs=[
            pl.BlockSpec((tm, d_x), lambda i: (i, 0)),   # batch-tiled x
            pl.BlockSpec((tm, d_p), lambda i: (i, 0)),   # batch-tiled prior
            _resident_spec(packed["w_fe"]),              # resident, lane-aligned
            _resident_spec(packed["w_pe"]),
            _resident_spec(packed["w1"]),
            _resident_spec(packed["w2"]),
            _resident_spec(packed["b"]),
        ],
        out_specs=pl.BlockSpec((tm, wpad), lambda i: (i, 0)),
        compiler_params=pltpu.CompilerParams(
            dimension_semantics=("parallel",),
            vmem_limit_bytes=vmem_limit),
        cost_estimate=pl.CostEstimate(
            flops=flops, transcendentals=0, bytes_accessed=bytes_accessed),
    )(x, prior, packed["w_fe"], packed["w_pe"], packed["w1"], packed["w2"],
      packed["b"])

    # Drop lane padding, restore f32, match the module's .squeeze().
    return jnp.squeeze(out[:, :out_dim].astype(jnp.float32))


# ---------------------------------------------------------------------------
# Deterministic parameters + pure-JAX reference
# ---------------------------------------------------------------------------
def make_params(key, d_x, d_p, hd_fe, hd_pe, hdim, out_dim):
    ks = jax.random.split(key, 10)
    s = 0.05
    return {
        "w_fe": s * jax.random.normal(ks[0], (d_x, hd_fe), jnp.float32),
        "b_fe": s * jax.random.normal(ks[1], (1, hd_fe), jnp.float32),
        "w_pe": s * jax.random.normal(ks[2], (d_p, hd_pe), jnp.float32),
        "b_pe": s * jax.random.normal(ks[3], (1, hd_pe), jnp.float32),
        "w1_x": s * jax.random.normal(ks[4], (hd_fe, hdim), jnp.float32),
        "w1_p": s * jax.random.normal(ks[5], (hd_pe, hdim), jnp.float32),
        "b1":   s * jax.random.normal(ks[6], (1, hdim), jnp.float32),
        "w2":   s * jax.random.normal(ks[7], (hdim, out_dim), jnp.float32),
        "b2":   s * jax.random.normal(ks[8], (1, out_dim), jnp.float32),
    }


def reference_forward(x, prior, p):
    xf = jnp.maximum(x @ p["w_fe"] + p["b_fe"], 0.0)
    pf = jnp.maximum(prior @ p["w_pe"] + p["b_pe"], 0.0)
    cat = jnp.concatenate([xf, pf], axis=1)
    w1 = jnp.concatenate([p["w1_x"], p["w1_p"]], axis=0)
    h = jnp.maximum(cat @ w1 + p["b1"], 0.0)              # dropout = identity (eval)
    return jnp.squeeze(h @ p["w2"] + p["b2"])


if __name__ == "__main__":
    B = 8
    D_X = 32          # raw feature-input dim
    D_P = 16          # raw prior-input dim
    HD_FE = 32        # feature_encoder.hdim
    HD_PE = 32        # prior_encoder.hdim
    HDIM = 128        # linear1 hidden dim
    OUT_DIM = 2

    key = jax.random.PRNGKey(0)
    k_x, k_p, k_w = jax.random.split(key, 3)

    x = jax.random.normal(k_x, (B, D_X), jnp.float32)
    prior = jax.random.normal(k_p, (B, D_P), jnp.float32)
    params = make_params(k_w, D_X, D_P, HD_FE, HD_PE, HDIM, OUT_DIM)
    ref = reference_forward(x, prior, params)

    # Exact f32 path — tight functional check.
    packed_f32 = pack_params(params, compute_dtype=jnp.float32)
    out_f32 = jax.block_until_ready(
        value_network_prior_forward(x, prior, packed_f32, out_dtype=jnp.float32))

    # Default perf path — bf16 MXU operands + bf16 writeback.
    packed_bf16 = pack_params(params)
    out_bf16 = jax.block_until_ready(
        value_network_prior_forward(x, prior, packed_bf16))

    assert out_f32.shape == ref.shape == (B, OUT_DIM), (out_f32.shape, ref.shape)
    assert out_bf16.shape == ref.shape, (out_bf16.shape, ref.shape)
    assert jnp.allclose(out_f32, ref, atol=1e-4, rtol=1e-4), "f32 mismatch vs reference"
    assert jnp.allclose(out_bf16, ref, atol=3e-2, rtol=3e-2), "bf16 mismatch vs reference"

    print("KERNEL_OK")
</pallas_src>

<mosaic_0001>
module attributes {stable_mosaic.version = 11 : i64} {
  func.func @_kernel(%arg0: i32, %arg1: memref<8x32xf32, #tpu.memory_space<vmem>>, %arg2: memref<8x16xf32, #tpu.memory_space<vmem>>, %arg3: memref<32x128xf32, #tpu.memory_space<vmem>>, %arg4: memref<16x128xf32, #tpu.memory_space<vmem>>, %arg5: memref<128x128xf32, #tpu.memory_space<vmem>>, %arg6: memref<128x128xf32, #tpu.memory_space<vmem>>, %arg7: memref<3x128xf32, #tpu.memory_space<vmem>>, %arg8: memref<8x128xf32, #tpu.memory_space<vmem>>) attributes {dimension_semantics = [#tpu.dimension_semantics<parallel>], iteration_bounds = array<i64: 1>, scalar_prefetch = 0 : i64, scratch_operands = 0 : i64, tpu.core_type = #tpu.core_type<tc>, window_params = [{transform_indices = @transform_0, window_bounds = array<i64: 8, 32>}, {transform_indices = @transform_1, window_bounds = array<i64: 8, 16>}, {pipeline_mode = #tpu.pipeline_mode<synchronous>, transform_indices = @transform_2, window_bounds = array<i64: 32, 128>}, {pipeline_mode = #tpu.pipeline_mode<synchronous>, transform_indices = @transform_3, window_bounds = array<i64: 16, 128>}, {pipeline_mode = #tpu.pipeline_mode<synchronous>, transform_indices = @transform_4, window_bounds = array<i64: 128, 128>}, {pipeline_mode = #tpu.pipeline_mode<synchronous>, transform_indices = @transform_5, window_bounds = array<i64: 128, 128>}, {pipeline_mode = #tpu.pipeline_mode<synchronous>, transform_indices = @transform_6, window_bounds = array<i64: 3, 128>}, {transform_indices = @transform_7, window_bounds = array<i64: 8, 128>}]} {
    %c0 = arith.constant 0 : index
    %c0_0 = arith.constant 0 : index
    %0 = vector.load %arg3[%c0, %c0_0] : memref<32x128xf32, #tpu.memory_space<vmem>>, vector<32x128xf32>
    %c0_1 = arith.constant 0 : index
    %c0_2 = arith.constant 0 : index
    %1 = vector.load %arg1[%c0_1, %c0_2] : memref<8x32xf32, #tpu.memory_space<vmem>>, vector<8x32xf32>
    %cst = arith.constant dense<0.000000e+00> : vector<8x128xf32>
    %2 = tpu.matmul %1, %0, %cst {dimension_numbers = #tpu.dot_dimension_numbers<[1], [0], [0], [1], [0, 0, 1, 1], [], []>} : vector<8x32xf32>, vector<32x128xf32>, vector<8x128xf32> -> vector<8x128xf32>
    %c0_3 = arith.constant 0 : index
    %c0_4 = arith.constant 0 : index
    %3 = vector.load %arg2[%c0_3, %c0_4] : memref<8x16xf32, #tpu.memory_space<vmem>>, vector<8x16xf32>
    %c0_5 = arith.constant 0 : index
    %c0_6 = arith.constant 0 : index
    %4 = vector.load %arg4[%c0_5, %c0_6] : memref<16x128xf32, #tpu.memory_space<vmem>>, vector<16x128xf32>
    %cst_7 = arith.constant dense<0.000000e+00> : vector<8x128xf32>
    %5 = tpu.matmul %3, %4, %cst_7 {dimension_numbers = #tpu.dot_dimension_numbers<[1], [0], [0], [1], [0, 0, 1, 1], [], []>} : vector<8x16xf32>, vector<16x128xf32>, vector<8x128xf32> -> vector<8x128xf32>
    %6 = arith.addf %2, %5 : vector<8x128xf32>
    %c0_8 = arith.constant 0 : index
    %c0_9 = arith.constant 0 : index
    %7 = vector.load %arg7[%c0_8, %c0_9] : memref<3x128xf32, #tpu.memory_space<vmem>>, vector<1x128xf32>
    %8 = vector.broadcast %7 : vector<1x128xf32> to vector<8x128xf32>
    %9 = arith.addf %6, %8 : vector<8x128xf32>
    %cst_10 = arith.constant 0.000000e+00 : f32
    %10 = vector.broadcast %cst_10 : f32 to vector<8x128xf32>
    %11 = arith.maximumf %9, %10 : vector<8x128xf32>
    %c0_11 = arith.constant 0 : index
    %c0_12 = arith.constant 0 : index
    %12 = vector.load %arg5[%c0_11, %c0_12] : memref<128x128xf32, #tpu.memory_space<vmem>>, vector<128x128xf32>
    %cst_13 = arith.constant dense<0.000000e+00> : vector<8x128xf32>
    %13 = tpu.matmul %11, %12, %cst_13 {dimension_numbers = #tpu.dot_dimension_numbers<[1], [0], [0], [1], [0, 0, 1, 1], [], []>} : vector<8x128xf32>, vector<128x128xf32>, vector<8x128xf32> -> vector<8x128xf32>
    %c1 = arith.constant 1 : index
    %c0_14 = arith.constant 0 : index
    %14 = vector.load %arg7[%c1, %c0_14] : memref<3x128xf32, #tpu.memory_space<vmem>>, vector<1x128xf32>
    %15 = vector.broadcast %14 : vector<1x128xf32> to vector<8x128xf32>
    %16 = arith.addf %13, %15 : vector<8x128xf32>
    %cst_15 = arith.constant 0.000000e+00 : f32
    %17 = vector.broadcast %cst_15 : f32 to vector<8x128xf32>
    %18 = arith.maximumf %16, %17 : vector<8x128xf32>
    %c0_16 = arith.constant 0 : index
    %c0_17 = arith.constant 0 : index
    %19 = vector.load %arg6[%c0_16, %c0_17] : memref<128x128xf32, #tpu.memory_space<vmem>>, vector<128x128xf32>
    %cst_18 = arith.constant dense<0.000000e+00> : vector<8x128xf32>
    %20 = tpu.matmul %18, %19, %cst_18 {dimension_numbers = #tpu.dot_dimension_numbers<[1], [0], [0], [1], [0, 0, 1, 1], [], []>} : vector<8x128xf32>, vector<128x128xf32>, vector<8x128xf32> -> vector<8x128xf32>
    %c2 = arith.constant 2 : index
    %c0_19 = arith.constant 0 : index
    %21 = vector.load %arg7[%c2, %c0_19] : memref<3x128xf32, #tpu.memory_space<vmem>>, vector<1x128xf32>
    %22 = vector.broadcast %21 : vector<1x128xf32> to vector<8x128xf32>
    %23 = arith.addf %20, %22 : vector<8x128xf32>
    %c0_20 = arith.constant 0 : index
    %c0_21 = arith.constant 0 : index
    %24 = vector.load %arg8[%c0_20, %c0_21] : memref<8x128xf32, #tpu.memory_space<vmem>>, vector<8x128xf32>
    tpu.vector_store %arg8[%c0_20, %c0_21], %23 {strides = array<i32>} : memref<8x128xf32, #tpu.memory_space<vmem>>, vector<8x128xf32>,
    return
  }
  func.func @transform_0(%arg0: i32) -> (i32, i32) {
    %c0_i32 = arith.constant 0 : i32
    %c0_i32_0 = arith.constant 0 : i32
    return %arg0, %c0_i32 : i32, i32
  }
  func.func @transform_1(%arg0: i32) -> (i32, i32) {
    %c0_i32 = arith.constant 0 : i32
    %c0_i32_0 = arith.constant 0 : i32
    return %arg0, %c0_i32 : i32, i32
  }
  func.func @transform_2(%arg0: i32) -> (i32, i32) {
    %c0_i32 = arith.constant 0 : i32
    %c0_i32_0 = arith.constant 0 : i32
    %c0_i32_1 = arith.constant 0 : i32
    return %c0_i32, %c0_i32_0 : i32, i32
  }
  func.func @transform_3(%arg0: i32) -> (i32, i32) {
    %c0_i32 = arith.constant 0 : i32
    %c0_i32_0 = arith.constant 0 : i32
    %c0_i32_1 = arith.constant 0 : i32
    return %c0_i32, %c0_i32_0 : i32, i32
  }
  func.func @transform_4(%arg0: i32) -> (i32, i32) {
    %c0_i32 = arith.constant 0 : i32
    %c0_i32_0 = arith.constant 0 : i32
    %c0_i32_1 = arith.constant 0 : i32
    return %c0_i32, %c0_i32_0 : i32, i32
  }
  func.func @transform_5(%arg0: i32) -> (i32, i32) {
    %c0_i32 = arith.constant 0 : i32
    %c0_i32_0 = arith.constant 0 : i32
    %c0_i32_1 = arith.constant 0 : i32
    return %c0_i32, %c0_i32_0 : i32, i32
  }
  func.func @transform_6(%arg0: i32) -> (i32, i32) {
    %c0_i32 = arith.constant 0 : i32
    %c0_i32_0 = arith.constant 0 : i32
    %c0_i32_1 = arith.constant 0 : i32
    return %c0_i32, %c0_i32_0 : i32, i32
  }
  func.func @transform_7(%arg0: i32) -> (i32, i32) {
    %c0_i32 = arith.constant 0 : i32
    %c0_i32_0 = arith.constant 0 : i32
    return %arg0, %c0_i32 : i32, i32
  }
}

</mosaic_0001>

<llo_original>
// kernel: tpu_custom_call.1
$region0: #{tpu_custom_call.1}
  #allocation0 [shape = 'u32[]', space=smem, size = 0x4, offset = 0x4, fixed_abs, tag = 'smem constant byte address 0x4 - core index']
  #allocation1 [shape = 'u32[144,128]{1,0:T(1,128)}', space=vmem, size = 0x12000, scoped, tag = 'internal scratch']
  %s0 = inlined_call_operand.hbm [shape: f32[8,32], index: 0, kind: input, shape index: {}]
  %s1 = inlined_call_operand.hbm [shape: f32[8,16], index: 1, kind: input, shape index: {}]
  %s2 = inlined_call_operand.hbm [shape: f32[32,128], index: 2, kind: input, shape index: {}]
  %s3 = inlined_call_operand.hbm [shape: f32[16,128], index: 3, kind: input, shape index: {}]
  %s4 = inlined_call_operand.hbm [shape: f32[128,128], index: 4, kind: input, shape index: {}]
  %s5 = inlined_call_operand.hbm [shape: f32[128,128], index: 5, kind: input, shape index: {}]
  %s6 = inlined_call_operand.vmem [shape: f32[3,128], index: 6, kind: input, shape index: {}]
  %s7 = inlined_call_operand.hbm [shape: f32[8,128], index: 7, kind: output, shape index: {}]
  %s8 = sld [smem:[#allocation0]]
  $region62: #{tpu_custom_call.1} parent=0
    _
  %s10 = ssub.s32 1, %s8
  %s11 = scalar_select 0, %s10, %s8
  $region1: #{tpu_custom_call.1} parent=0
    #allocation2 [shape = 'u8[4096]{0}', space=vmem, size = 0x1000, scoped, tag = 'input window, operand 0, single buffered']
    #allocation3 [shape = 's32[1]{0}', space=sflag, size = 0x4, scoped, tag = 'scoped memory for tpu_custom_call.1']
    #allocation4 [shape = 's32[1]{0}', space=sflag, size = 0x4, scoped, tag = 'scoped memory for tpu_custom_call.1']
    #allocation5 [shape = 'u8[4096]{0}', space=vmem, size = 0x1000, scoped, tag = 'input window, operand 1, single buffered']
    #allocation6 [shape = 's32[1]{0}', space=sflag, size = 0x4, scoped, tag = 'scoped memory for tpu_custom_call.1']
    #allocation7 [shape = 'u8[16384]{0}', space=vmem, size = 0x4000, scoped, tag = 'input window, operand 2, single buffered']
    #allocation8 [shape = 'u8[8192]{0}', space=vmem, size = 0x2000, scoped, tag = 'input window, operand 3, single buffered']
    #allocation9 [shape = 's32[1]{0}', space=sflag, size = 0x4, scoped, tag = 'scoped memory for tpu_custom_call.1']
    #allocation10 [shape = 'u8[65536]{0}', space=vmem, size = 0x10000, scoped, tag = 'input window, operand 4, single buffered']
    #allocation11 [shape = 'u8[65536]{0}', space=vmem, size = 0x10000, scoped, tag = 'input window, operand 5, single buffered']
    #allocation12 [shape = 's32[1]{0}', space=sflag, size = 0x4, scoped, tag = 'scoped memory for tpu_custom_call.1']
    #allocation13 [shape = 'u8[4096]{0}', space=vmem, size = 0x1000, scoped, tag = 'output window, operand 0, single buffered']
    %12 = vsyncpa [#allocation3], 0
    %13 = vsyncpa [#allocation6], 0
    %14 = vsyncpa [#allocation9], 0
    %15 = vsyncpa [#allocation12], 0
    %16 = vsyncpa [#allocation4], 0
    // Predicated region
    $region2: #{tpu_custom_call.1} parent=1 // pred_check
      _
    $region3: #{tpu_custom_call.1} parent=1 // pred_check_branch
      %18 = sbr.rel (0) target = $region5
    $region4: #{tpu_custom_call.1} parent=1 // pred_region
      %s20 = ssub.s32 128, 128
      %21 = vsyncadd [#allocation3], %s20
      %s23 = sshll.u32 [#allocation2], 4
      %s24 = int_to_ptr.vmem [resolvable:$true] %s23
      %26 = dma.hbm_to_vmem [thread:$0]  %s0, 128, %s24, [#allocation3]
    $region5: #{tpu_custom_call.1} parent=1 // pred_fallthru
      _
    // Predicated region
    $region6: #{tpu_custom_call.1} parent=1 // pred_check
      _
    $region7: #{tpu_custom_call.1} parent=1 // pred_check_branch
      %28 = sbr.rel (0) target = $region9
    $region8: #{tpu_custom_call.1} parent=1 // pred_region
      %s30 = ssub.s32 128, 128
      %31 = vsyncadd [#allocation6], %s30
      %s33 = sshll.u32 [#allocation5], 4
      %s34 = int_to_ptr.vmem [resolvable:$true] %s33
      %36 = dma.hbm_to_vmem [thread:$0]  %s1, 128, %s34, [#allocation6]
    $region9: #{tpu_custom_call.1} parent=1 // pred_fallthru
      _
    // Predicated region
    $region10: #{tpu_custom_call.1} parent=1 // pred_check
      _
    $region11: #{tpu_custom_call.1} parent=1 // pred_check_branch
      %38 = sbr.rel (0) target = $region13
    $region12: #{tpu_custom_call.1} parent=1 // pred_region
      %s40 = ssub.s32 512, 512
      %41 = vsyncadd [#allocation6], %s40
      %s42 = sshll.u32 [#allocation7], 4
      %s43 = int_to_ptr.vmem [resolvable:$true] %s42
      %48 = dma.hbm_to_vmem [thread:$0]  %s2, 512, %s43, [#allocation6], 128, 128, 8
    $region13: #{tpu_custom_call.1} parent=1 // pred_fallthru
      _
    // Predicated region
    $region14: #{tpu_custom_call.1} parent=1 // pred_check
      _
    $region15: #{tpu_custom_call.1} parent=1 // pred_check_branch
      %50 = sbr.rel (0) target = $region17
    $region16: #{tpu_custom_call.1} parent=1 // pred_region
      %s52 = ssub.s32 256, 256
      %53 = vsyncadd [#allocation9], %s52
      %s54 = sshll.u32 [#allocation8], 4
      %s55 = int_to_ptr.vmem [resolvable:$true] %s54
      %60 = dma.hbm_to_vmem [thread:$0]  %s3, 256, %s55, [#allocation9], 128, 128, 8
    $region17: #{tpu_custom_call.1} parent=1 // pred_fallthru
      _
    // Predicated region
    $region18: #{tpu_custom_call.1} parent=1 // pred_check
      _
    $region19: #{tpu_custom_call.1} parent=1 // pred_check_branch
      %62 = sbr.rel (0) target = $region21
    $region20: #{tpu_custom_call.1} parent=1 // pred_region
      %s64 = ssub.s32 2048, 2048
      %65 = vsyncadd [#allocation9], %s64
      %s66 = sshll.u32 [#allocation10], 4
      %s67 = int_to_ptr.vmem [resolvable:$true] %s66
      %72 = dma.hbm_to_vmem [thread:$0]  %s4, 2048, %s67, [#allocation9], 128, 128, 8
    $region21: #{tpu_custom_call.1} parent=1 // pred_fallthru
      _
    // Predicated region
    $region22: #{tpu_custom_call.1} parent=1 // pred_check
      _
    $region23: #{tpu_custom_call.1} parent=1 // pred_check_branch
      %74 = sbr.rel (0) target = $region25
    $region24: #{tpu_custom_call.1} parent=1 // pred_region
      %s76 = ssub.s32 2048, 2048
      %77 = vsyncadd [#allocation12], %s76
      %s78 = sshll.u32 [#allocation11], 4
      %s79 = int_to_ptr.vmem [resolvable:$true] %s78
      %84 = dma.hbm_to_vmem [thread:$0]  %s5, 2048, %s79, [#allocation12], 128, 128, 8
    $region25: #{tpu_custom_call.1} parent=1 // pred_fallthru
      _
    // Predicated region
    $region26: #{tpu_custom_call.1} parent=1 // pred_check
      _
    $region27: #{tpu_custom_call.1} parent=1 // pred_check_branch
      %86 = sbr.rel (0) target = $region29
    $region28: #{tpu_custom_call.1} parent=1 // pred_region
      _
    $region29: #{tpu_custom_call.1} parent=1 // pred_fallthru
      _
    // Predicated region
    $region30: #{tpu_custom_call.1} parent=1 // pred_check
      _
    $region31: #{tpu_custom_call.1} parent=1 // pred_check_branch
      %88 = sbr.rel (0) target = $region33
    $region32: #{tpu_custom_call.1} parent=1 // pred_region
      %89 = dma.done [#allocation3], 128
    $region33: #{tpu_custom_call.1} parent=1 // pred_fallthru
      _
    // Predicated region
    $region34: #{tpu_custom_call.1} parent=1 // pred_check
      _
    $region35: #{tpu_custom_call.1} parent=1 // pred_check_branch
      %91 = sbr.rel (0) target = $region37
    $region36: #{tpu_custom_call.1} parent=1 // pred_region
      %92 = dma.done [#allocation6], 128
    $region37: #{tpu_custom_call.1} parent=1 // pred_fallthru
      _
    // Predicated region
    $region38: #{tpu_custom_call.1} parent=1 // pred_check
      _
    $region39: #{tpu_custom_call.1} parent=1 // pred_check_branch
      %94 = sbr.rel (0) target = $region41
    $region40: #{tpu_custom_call.1} parent=1 // pred_region
      %95 = dma.done [#allocation6], 512
    $region41: #{tpu_custom_call.1} parent=1 // pred_fallthru
      _
    // Predicated region
    $region42: #{tpu_custom_call.1} parent=1 // pred_check
      _
    $region43: #{tpu_custom_call.1} parent=1 // pred_check_branch
      %97 = sbr.rel (0) target = $region45
    $region44: #{tpu_custom_call.1} parent=1 // pred_region
      %98 = dma.done [#allocation9], 256
    $region45: #{tpu_custom_call.1} parent=1 // pred_fallthru
      _
    // Predicated region
    $region46: #{tpu_custom_call.1} parent=1 // pred_check
      _
    $region47: #{tpu_custom_call.1} parent=1 // pred_check_branch
      %100 = sbr.rel (0) target = $region49
    $region48: #{tpu_custom_call.1} parent=1 // pred_region
      %101 = dma.done [#allocation9], 2048
    $region49: #{tpu_custom_call.1} parent=1 // pred_fallthru
      _
    // Predicated region
    $region50: #{tpu_custom_call.1} parent=1 // pred_check
      _
    $region51: #{tpu_custom_call.1} parent=1 // pred_check_branch
      %103 = sbr.rel (0) target = $region53
    $region52: #{tpu_custom_call.1} parent=1 // pred_region
      %104 = dma.done [#allocation12], 2048
    $region53: #{tpu_custom_call.1} parent=1 // pred_fallthru
      _
    %v105 = vld [vmem:[#allocation7] sm:$0xff]
    %v106 = vld [vmem:[#allocation7 + $0x8] sm:$0xff]
    %v107 = vld [vmem:[#allocation7 + $0x10] sm:$0xff]
    %v108 = vld [vmem:[#allocation7 + $0x18] sm:$0xff]
    %v109 = vld [vmem:[#allocation2] sm:$0xff]
    %v110 = vld [vmem:[#allocation5] sm:$0xff]
    %v111 = vld [vmem:[#allocation8] sm:$0xff]
    %v112 = vld [vmem:[#allocation8 + $0x8] sm:$0xff]
    %vm113 = vcmask 130048
    %v115 = vsel %vm113, %v110, 0
    %117 = vmatprep.subr.mxu0 0.0
    %118 = vmatpush1.msra.mxu0 %v111
    %119 = vmatprep.subr.mxu0 0.0
    %120 = vmatpush1.msra.mxu0 %v112
    %121 = vmatprep.subr.mxu0 0.0
    %122 = vmatpush1.msra.mxu0 0.0
    %123 = vmatprep.subr.mxu0 0.0
    %124 = vmatpush1.msra.mxu0 0.0
    %125 = vmatprep.subr.mxu0 0.0
    %126 = vmatpush1.msra.mxu0 0.0
    %127 = vmatprep.subr.mxu0 0.0
    %128 = vmatpush1.msra.mxu0 0.0
    %129 = vmatprep.subr.mxu0 0.0
    %130 = vmatpush1.msra.mxu0 0.0
    %131 = vmatprep.subr.mxu0 0.0
    %132 = vmatpush1.msra.mxu0 0.0
    %133 = vmatprep.subr.mxu0 0.0
    %134 = vmatpush1.msra.mxu0 0.0
    %135 = vmatprep.subr.mxu0 0.0
    %136 = vmatpush1.msra.mxu0 0.0
    %137 = vmatprep.subr.mxu0 0.0
    %138 = vmatpush1.msra.mxu0 0.0
    %139 = vmatprep.subr.mxu0 0.0
    %140 = vmatpush1.msra.mxu0 0.0
    %141 = vmatprep.subr.mxu0 0.0
    %142 = vmatpush1.msra.mxu0 0.0
    %143 = vmatprep.subr.mxu0 0.0
    %144 = vmatpush1.msra.mxu0 0.0
    %145 = vmatprep.subr.mxu0 0.0
    %146 = vmatpush1.msra.mxu0 0.0
    %147 = vmatprep.subr.mxu0 0.0
    %148 = vmatpush1.msra.mxu0 0.0
    %149 = vmatprep.subr.mxu0 0.0
    %150 = vmatpush1.msra.mxu0 0.0
    %151 = vmatprep.subr.mxu0 0.0
    %152 = vmatpush1.msra.mxu0 0.0
    %153 = vmatprep.subr.mxu0 0.0
    %154 = vmatpush1.msra.mxu0 0.0
    %155 = vmatprep.subr.mxu0 0.0
    %156 = vmatpush1.msra.mxu0 0.0
    %157 = vmatprep.subr.mxu0 0.0
    %158 = vmatpush1.msra.mxu0 0.0
    %159 = vmatprep.subr.mxu0 0.0
    %160 = vmatpush1.msra.mxu0 0.0
    %161 = vmatprep.subr.mxu0 0.0
    %162 = vmatpush1.msra.mxu0 0.0
    %163 = vmatprep.subr.mxu0 0.0
    %164 = vmatpush1.msra.mxu0 0.0
    %165 = vmatprep.subr.mxu0 0.0
    %166 = vmatpush1.msra.mxu0 0.0
    %167 = vmatprep.subr.mxu0 0.0
    %168 = vmatpush1.msra.mxu0 0.0
    %169 = vmatprep.subr.mxu0 0.0
    %170 = vmatpush1.msra.mxu0 0.0
    %171 = vmatprep.subr.mxu0 0.0
    %172 = vmatpush1.msra.mxu0 0.0
    %173 = vmatprep.subr.mxu0 0.0
    %174 = vmatpush1.msra.mxu0 0.0
    %175 = vmatprep.subr.mxu0 0.0
    %176 = vmatpush1.msra.mxu0 0.0
    %177 = vmatprep.subr.mxu0 0.0
    %178 = vmatpush1.msra.mxu0 0.0
    %179 = vmatprep.subr.mxu0 0.0
    %180 = vmatpush1.msra.mxu0 0.0
    %181 = vmatprep.mubr.f32.mxu0 0.0
    %182 = vmatmul.mubr.f32.gmra.mrb[0].mxu0 %v115
    %v183 = vpop.f32.mrb[0].mxu0
    %v184 = vadd.f32 0.0, %v183
    %v185 = vpop.f32.mrb[0].mxu0
    %186 = vdwg.mxu0
    %vm187 = vcmask 261120
    %v189 = vsel %vm187, %v109, 0
    %191 = vmatprep.subr.mxu0 0.0
    %192 = vmatpush1.msra.mxu0 %v105
    %193 = vmatprep.subr.mxu0 0.0
    %194 = vmatpush1.msra.mxu0 %v106
    %195 = vmatprep.subr.mxu0 0.0
    %196 = vmatpush1.msra.mxu0 %v107
    %197 = vmatprep.subr.mxu0 0.0
    %198 = vmatpush1.msra.mxu0 %v108
    %199 = vmatprep.subr.mxu0 0.0
    %200 = vmatpush1.msra.mxu0 0.0
    %201 = vmatprep.subr.mxu0 0.0
    %202 = vmatpush1.msra.mxu0 0.0
    %203 = vmatprep.subr.mxu0 0.0
    %204 = vmatpush1.msra.mxu0 0.0
    %205 = vmatprep.subr.mxu0 0.0
    %206 = vmatpush1.msra.mxu0 0.0
    %207 = vmatprep.subr.mxu0 0.0
    %208 = vmatpush1.msra.mxu0 0.0
    %209 = vmatprep.subr.mxu0 0.0
    %210 = vmatpush1.msra.mxu0 0.0
    %211 = vmatprep.subr.mxu0 0.0
    %212 = vmatpush1.msra.mxu0 0.0
    %213 = vmatprep.subr.mxu0 0.0
    %214 = vmatpush1.msra.mxu0 0.0
    %215 = vmatprep.subr.mxu0 0.0
    %216 = vmatpush1.msra.mxu0 0.0
    %217 = vmatprep.subr.mxu0 0.0
    %218 = vmatpush1.msra.mxu0 0.0
    %219 = vmatprep.subr.mxu0 0.0
    %220 = vmatpush1.msra.mxu0 0.0
    %221 = vmatprep.subr.mxu0 0.0
    %222 = vmatpush1.msra.mxu0 0.0
    %223 = vmatprep.subr.mxu0 0.0
    %224 = vmatpush1.msra.mxu0 0.0
    %225 = vmatprep.subr.mxu0 0.0
    %226 = vmatpush1.msra.mxu0 0.0
    %227 = vmatprep.subr.mxu0 0.0
    %228 = vmatpush1.msra.mxu0 0.0
    %229 = vmatprep.subr.mxu0 0.0
    %230 = vmatpush1.msra.mxu0 0.0
    %231 = vmatprep.subr.mxu0 0.0
    %232 = vmatpush1.msra.mxu0 0.0
    %233 = vmatprep.subr.mxu0 0.0
    %234 = vmatpush1.msra.mxu0 0.0
    %235 = vmatprep.subr.mxu0 0.0
    %236 = vmatpush1.msra.mxu0 0.0
    %237 = vmatprep.subr.mxu0 0.0
    %238 = vmatpush1.msra.mxu0 0.0
    %239 = vmatprep.subr.mxu0 0.0
    %240 = vmatpush1.msra.mxu0 0.0
    %241 = vmatprep.subr.mxu0 0.0
    %242 = vmatpush1.msra.mxu0 0.0
    %243 = vmatprep.subr.mxu0 0.0
    %244 = vmatpush1.msra.mxu0 0.0
    %245 = vmatprep.subr.mxu0 0.0
    %246 = vmatpush1.msra.mxu0 0.0
    %247 = vmatprep.subr.mxu0 0.0
    %248 = vmatpush1.msra.mxu0 0.0
    %249 = vmatprep.subr.mxu0 0.0
    %250 = vmatpush1.msra.mxu0 0.0
    %251 = vmatprep.subr.mxu0 0.0
    %252 = vmatpush1.msra.mxu0 0.0
    %253 = vmatprep.subr.mxu0 0.0
    %254 = vmatpush1.msra.mxu0 0.0
    %255 = vmatprep.mubr.f32.mxu0 0.0
    %256 = vmatmul.mubr.f32.gmra.mrb[0].mxu0 %v189
    %v257 = vpop.f32.mrb[0].mxu0
    %v258 = vadd.f32 %v184, %v257
    %v259 = vpop.f32.mrb[0].mxu0
    %260 = vdwg.mxu0
    %v261 = vld [vmem:[%s6] sm:$0x1]
    %v262 = vlaneseq
    %v263 = vshrl.u32 %v262, 7
    %v264 = vsub.s32 0, %v263
    %v265 = vrot.slane %v261, %v264
    %v266 = vadd.f32 %v258, %v265
    %v267 = vmax.f32 %v266, 0.0
    %v268 = vld [vmem:[#allocation10] sm:$0xff]
    %v269 = vld [vmem:[#allocation10 + $0x8] sm:$0xff]
    %v270 = vld [vmem:[#allocation10 + $0x10] sm:$0xff]
    %v271 = vld [vmem:[#allocation10 + $0x18] sm:$0xff]
    %v272 = vld [vmem:[#allocation10 + $0x20] sm:$0xff]
    %v273 = vld [vmem:[#allocation10 + $0x28] sm:$0xff]
    %v274 = vld [vmem:[#allocation10 + $0x30] sm:$0xff]
    %v275 = vld [vmem:[#allocation10 + $0x38] sm:$0xff]
    %v276 = vld [vmem:[#allocation10 + $0x40] sm:$0xff]
    %v277 = vld [vmem:[#allocation10 + $0x48] sm:$0xff]
    %v278 = vld [vmem:[#allocation10 + $0x50] sm:$0xff]
    %v279 = vld [vmem:[#allocation10 + $0x58] sm:$0xff]
    %v280 = vld [vmem:[#allocation10 + $0x60] sm:$0xff]
    %v281 = vld [vmem:[#allocation10 + $0x68] sm:$0xff]
    %v282 = vld [vmem:[#allocation10 + $0x70] sm:$0xff]
    %v283 = vld [vmem:[#allocation10 + $0x78] sm:$0xff]
    %v284 = vld [vmem:[%s6 + $0x1] sm:$0x1]
    %v285 = vlaneseq
    %v286 = vshrl.u32 %v285, 7
    %v287 = vsub.s32 0, %v286
    %v288 = vrot.slane %v284, %v287
    %289 = vmatprep.subr.mxu0 0.0
    %290 = vmatpush1.msra.mxu0 %v268
    %291 = vmatprep.subr.mxu0 0.0
    %292 = vmatpush1.msra.mxu0 %v269
    %293 = vmatprep.subr.mxu0 0.0
    %294 = vmatpush1.msra.mxu0 %v270
    %295 = vmatprep.subr.mxu0 0.0
    %296 = vmatpush1.msra.mxu0 %v271
    %297 = vmatprep.subr.mxu0 0.0
    %298 = vmatpush1.msra.mxu0 %v272
    %299 = vmatprep.subr.mxu0 0.0
    %300 = vmatpush1.msra.mxu0 %v273
    %301 = vmatprep.subr.mxu0 0.0
    %302 = vmatpush1.msra.mxu0 %v274
    %303 = vmatprep.subr.mxu0 0.0
    %304 = vmatpush1.msra.mxu0 %v275
    %305 = vmatprep.subr.mxu0 0.0
    %306 = vmatpush1.msra.mxu0 %v276
    %307 = vmatprep.subr.mxu0 0.0
    %308 = vmatpush1.msra.mxu0 %v277
    %309 = vmatprep.subr.mxu0 0.0
    %310 = vmatpush1.msra.mxu0 %v278
    %311 = vmatprep.subr.mxu0 0.0
    %312 = vmatpush1.msra.mxu0 %v279
    %313 = vmatprep.subr.mxu0 0.0
    %314 = vmatpush1.msra.mxu0 %v280
    %315 = vmatprep.subr.mxu0 0.0
    %316 = vmatpush1.msra.mxu0 %v281
    %317 = vmatprep.subr.mxu0 0.0
    %318 = vmatpush1.msra.mxu0 %v282
    %319 = vmatprep.subr.mxu0 0.0
    %320 = vmatpush1.msra.mxu0 %v283
    %321 = vmatprep.subr.mxu0 0.0
    %322 = vmatpush1.msra.mxu0 0.0
    %323 = vmatprep.subr.mxu0 0.0
    %324 = vmatpush1.msra.mxu0 0.0
    %325 = vmatprep.subr.mxu0 0.0
    %326 = vmatpush1.msra.mxu0 0.0
    %327 = vmatprep.subr.mxu0 0.0
    %328 = vmatpush1.msra.mxu0 0.0
    %329 = vmatprep.subr.mxu0 0.0
    %330 = vmatpush1.msra.mxu0 0.0
    %331 = vmatprep.subr.mxu0 0.0
    %332 = vmatpush1.msra.mxu0 0.0
    %333 = vmatprep.subr.mxu0 0.0
    %334 = vmatpush1.msra.mxu0 0.0
    %335 = vmatprep.subr.mxu0 0.0
    %336 = vmatpush1.msra.mxu0 0.0
    %337 = vmatprep.subr.mxu0 0.0
    %338 = vmatpush1.msra.mxu0 0.0
    %339 = vmatprep.subr.mxu0 0.0
    %340 = vmatpush1.msra.mxu0 0.0
    %341 = vmatprep.subr.mxu0 0.0
    %342 = vmatpush1.msra.mxu0 0.0
    %343 = vmatprep.subr.mxu0 0.0
    %344 = vmatpush1.msra.mxu0 0.0
    %345 = vmatprep.subr.mxu0 0.0
    %346 = vmatpush1.msra.mxu0 0.0
    %347 = vmatprep.subr.mxu0 0.0
    %348 = vmatpush1.msra.mxu0 0.0
    %349 = vmatprep.subr.mxu0 0.0
    %350 = vmatpush1.msra.mxu0 0.0
    %351 = vmatprep.subr.mxu0 0.0
    %352 = vmatpush1.msra.mxu0 0.0
    %353 = vmatprep.mubr.f32.mxu0 0.0
    %354 = vmatmul.mubr.f32.gmra.mrb[0].mxu0 %v267
    %v355 = vpop.f32.mrb[0].mxu0
    %v356 = vadd.f32 %v288, %v355
    %v357 = vpop.f32.mrb[0].mxu0
    %358 = vdwg.mxu0
    %v359 = vmax.f32 %v356, 0.0
    %v360 = vld [vmem:[#allocation11] sm:$0xff]
    %v361 = vld [vmem:[#allocation11 + $0x8] sm:$0xff]
    %v362 = vld [vmem:[#allocation11 + $0x10] sm:$0xff]
    %v363 = vld [vmem:[#allocation11 + $0x18] sm:$0xff]
    %v364 = vld [vmem:[#allocation11 + $0x20] sm:$0xff]
    %v365 = vld [vmem:[#allocation11 + $0x28] sm:$0xff]
    %v366 = vld [vmem:[#allocation11 + $0x30] sm:$0xff]
    %v367 = vld [vmem:[#allocation11 + $0x38] sm:$0xff]
    %v368 = vld [vmem:[#allocation11 + $0x40] sm:$0xff]
    %v369 = vld [vmem:[#allocation11 + $0x48] sm:$0xff]
    %v370 = vld [vmem:[#allocation11 + $0x50] sm:$0xff]
    %v371 = vld [vmem:[#allocation11 + $0x58] sm:$0xff]
    %v372 = vld [vmem:[#allocation11 + $0x60] sm:$0xff]
    %v373 = vld [vmem:[#allocation11 + $0x68] sm:$0xff]
    %v374 = vld [vmem:[#allocation11 + $0x70] sm:$0xff]
    %v375 = vld [vmem:[#allocation11 + $0x78] sm:$0xff]
    %v376 = vld [vmem:[%s6 + $0x2] sm:$0x1]
    %v377 = vlaneseq
    %v378 = vshrl.u32 %v377, 7
    %v379 = vsub.s32 0, %v378
    %v380 = vrot.slane %v376, %v379
    %381 = vmatprep.subr.mxu0 0.0
    %382 = vmatpush1.msra.mxu0 %v360
    %383 = vmatprep.subr.mxu0 0.0
    %384 = vmatpush1.msra.mxu0 %v361
    %385 = vmatprep.subr.mxu0 0.0
    %386 = vmatpush1.msra.mxu0 %v362
    %387 = vmatprep.subr.mxu0 0.0
    %388 = vmatpush1.msra.mxu0 %v363
    %389 = vmatprep.subr.mxu0 0.0
    %390 = vmatpush1.msra.mxu0 %v364
    %391 = vmatprep.subr.mxu0 0.0
    %392 = vmatpush1.msra.mxu0 %v365
    %393 = vmatprep.subr.mxu0 0.0
    %394 = vmatpush1.msra.mxu0 %v366
    %395 = vmatprep.subr.mxu0 0.0
    %396 = vmatpush1.msra.mxu0 %v367
    %397 = vmatprep.subr.mxu0 0.0
    %398 = vmatpush1.msra.mxu0 %v368
    %399 = vmatprep.subr.mxu0 0.0
    %400 = vmatpush1.msra.mxu0 %v369
    %401 = vmatprep.subr.mxu0 0.0
    %402 = vmatpush1.msra.mxu0 %v370
    %403 = vmatprep.subr.mxu0 0.0
    %404 = vmatpush1.msra.mxu0 %v371
    %405 = vmatprep.subr.mxu0 0.0
    %406 = vmatpush1.msra.mxu0 %v372
    %407 = vmatprep.subr.mxu0 0.0
    %408 = vmatpush1.msra.mxu0 %v373
    %409 = vmatprep.subr.mxu0 0.0
    %410 = vmatpush1.msra.mxu0 %v374
    %411 = vmatprep.subr.mxu0 0.0
    %412 = vmatpush1.msra.mxu0 %v375
    %413 = vmatprep.subr.mxu0 0.0
    %414 = vmatpush1.msra.mxu0 0.0
    %415 = vmatprep.subr.mxu0 0.0
    %416 = vmatpush1.msra.mxu0 0.0
    %417 = vmatprep.subr.mxu0 0.0
    %418 = vmatpush1.msra.mxu0 0.0
    %419 = vmatprep.subr.mxu0 0.0
    %420 = vmatpush1.msra.mxu0 0.0
    %421 = vmatprep.subr.mxu0 0.0
    %422 = vmatpush1.msra.mxu0 0.0
    %423 = vmatprep.subr.mxu0 0.0
    %424 = vmatpush1.msra.mxu0 0.0
    %425 = vmatprep.subr.mxu0 0.0
    %426 = vmatpush1.msra.mxu0 0.0
    %427 = vmatprep.subr.mxu0 0.0
    %428 = vmatpush1.msra.mxu0 0.0
    %429 = vmatprep.subr.mxu0 0.0
    %430 = vmatpush1.msra.mxu0 0.0
    %431 = vmatprep.subr.mxu0 0.0
    %432 = vmatpush1.msra.mxu0 0.0
    %433 = vmatprep.subr.mxu0 0.0
    %434 = vmatpush1.msra.mxu0 0.0
    %435 = vmatprep.subr.mxu0 0.0
    %436 = vmatpush1.msra.mxu0 0.0
    %437 = vmatprep.subr.mxu0 0.0
    %438 = vmatpush1.msra.mxu0 0.0
    %439 = vmatprep.subr.mxu0 0.0
    %440 = vmatpush1.msra.mxu0 0.0
    %441 = vmatprep.subr.mxu0 0.0
    %442 = vmatpush1.msra.mxu0 0.0
    %443 = vmatprep.subr.mxu0 0.0
    %444 = vmatpush1.msra.mxu0 0.0
    %445 = vmatprep.mubr.f32.mxu0 0.0
    %446 = vmatmul.mubr.f32.gmra.mrb[0].mxu0 %v359
    %v447 = vpop.f32.mrb[0].mxu0
    %v448 = vadd.f32 %v380, %v447
    %v449 = vpop.f32.mrb[0].mxu0
    %450 = vdwg.mxu0
    %451 = vst [vmem:[#allocation13] sm:$0xff] %v448
    // Predicated region
    $region54: #{tpu_custom_call.1} parent=1 // pred_check
      _
    $region55: #{tpu_custom_call.1} parent=1 // pred_check_branch
      %453 = sbr.rel (0) target = $region57
    $region56: #{tpu_custom_call.1} parent=1 // pred_region
      %s455 = ssub.s32 128, 128
      %456 = vsyncadd [#allocation4], %s455
      %s458 = sshll.u32 [#allocation13], 4
      %s459 = int_to_ptr.vmem [resolvable:$true] %s458
      %461 = dma.vmem_to_hbm [thread:$0]  %s459, 128, %s7, [#allocation4]
    $region57: #{tpu_custom_call.1} parent=1 // pred_fallthru
      _
    // Predicated region
    $region58: #{tpu_custom_call.1} parent=1 // pred_check
      _
    $region59: #{tpu_custom_call.1} parent=1 // pred_check_branch
      %463 = sbr.rel (0) target = $region61
    $region60: #{tpu_custom_call.1} parent=1 // pred_region
      %464 = dma.done [#allocation4], 128
    $region61: #{tpu_custom_call.1} parent=1 // pred_fallthru
      _
    %465 = vsyncpa [#allocation3], 1
    %466 = vsyncpa [#allocation6], 1
    %467 = vsyncpa [#allocation9], 1
    %468 = vsyncpa [#allocation12], 1
    %469 = vsyncpa [#allocation4], 1

</llo_original>
